<compile_context>
chip_gen: v7x
topology: tpu7x:2x2x1
jax: 0.10.0
libtpu: 0.0.40
codegen_flags: <defaults>
</compile_context>

<pallas_src>
import functools
import math

import jax
import jax.numpy as jnp
from jax.experimental import pallas as pl
from jax.experimental.pallas import tpu as pltpu

W_ROT = 100.0          # self.w_rot in the PyTorch module
_LANE = 128
_NUM_CORES = 2         # v7x has 2 TensorCores; harmless (serial) on v5e/v6e


def _round_up(x: int, m: int) -> int:
    return ((x + m - 1) // m) * m


def _weighted_loss_kernel(pred_ref, tgt_ref, out_ref, w_ref, *,
                          c: int, tile_r: int, tiles_per_core: int,
                          rows_valid: int, inv_n_t: float,
                          w_rot_over_n_r: float):
    p = pl.program_id(0)          # core-parallel axis
    i = pl.program_id(1)          # sequential reduction axis

    @pl.when(i == 0)
    def _init():
        # Per-element weight tile.  tile_r*128 % c == 0, so the channel pattern
        # is identical for every tile -> build once per core sweep (hoisted out
        # of the per-step body; JAX does not CSE broadcast/iota across steps).
        r = jax.lax.broadcasted_iota(jnp.int32, (tile_r, _LANE), 0)
        l = jax.lax.broadcasted_iota(jnp.int32, (tile_r, _LANE), 1)
        ch = (r * _LANE + l) % c
        w_ref[...] = jnp.where(ch < 3, jnp.float32(inv_n_t),
                               jnp.float32(w_rot_over_n_r))
        out_ref[...] = jnp.zeros_like(out_ref)

    # f32 math (v5e has no bf16 VPU/EUP path); cast is a no-op for f32 inputs.
    diff = pred_ref[...].astype(jnp.float32) - tgt_ref[...].astype(jnp.float32)

    def accumulate(d):
        wsq = d * d * w_ref[...]
        # Fold rows down to one (8,128) partial with pure VALU adds; the
        # reshape is layout-free (minor (8,128) block == one vreg tile).
        out_ref[...] += wsq.reshape(tile_r // 8, 8, _LANE).sum(axis=0)

    tile_idx = p * tiles_per_core + i      # logical tile (may exceed the last)
    row_off = tile_idx * tile_r
    partial = row_off + tile_r > rows_valid   # scalar: tile touches the end

    @pl.when(jnp.logical_not(partial))
    def _full_tile():                      # steady state: no masking cost
        accumulate(diff)

    @pl.when(partial)
    def _boundary_tile():                  # mask OOB/garbage rows to zero
        rid = jax.lax.broadcasted_iota(jnp.int32, (tile_r, 1), 0) + row_off
        accumulate(jnp.where(rid < rows_valid, diff, 0.0))


def weighted_loss(pred: jax.Array, target: jax.Array, *,
                  tile_rows: int = 7168) -> jax.Array:
    """Pallas equivalent of WeightedLoss.forward. Returns a scalar f32."""
    assert pred.shape == target.shape and pred.ndim == 3
    b, s, c = pred.shape
    assert c > 3, "pose dim must have >3 channels (3 translation + rotation)"

    n_t = b * s * 3          # element count of pred[:, :, :3]
    n_r = b * s * (c - 3)    # element count of pred[:, :, 3:]
    n = b * s * c

    # Lane-dense flat view.  When n % 128 == 0 this is a free bitcast-reshape
    # (no extra HBM pass).  Otherwise pad the flat tail with zeros (zeros
    # contribute nothing to either squared-error sum).
    # TODO(synk): non-128-divisible flat sizes still pay one zero-pad copy; a
    # fully copy-free path would need prefix aliasing or manual flat-chunk DMA.
    rows = pl.cdiv(n, _LANE)
    if n % _LANE == 0:
        pred2d = pred.reshape(rows, _LANE)
        tgt2d = target.reshape(rows, _LANE)
    else:
        pad = rows * _LANE - n
        pred2d = jnp.pad(pred.reshape(-1), (0, pad)).reshape(rows, _LANE)
        tgt2d = jnp.pad(target.reshape(-1), (0, pad)).reshape(rows, _LANE)

    # Tile rows: multiple of 8 (sublanes) and of c/gcd(c,128) so that
    # tile_r*128 % c == 0 (step-invariant weight tile).  c=7 -> multiple of 56.
    base = math.lcm(8, c // math.gcd(c, _LANE))
    tile_r = max(base, (tile_rows // base) * base)
    tile_r = min(tile_r, _round_up(rows, base))

    n_tiles = pl.cdiv(rows, tile_r)
    tiles_per_core = pl.cdiv(n_tiles, _NUM_CORES)

    kernel = functools.partial(
        _weighted_loss_kernel,
        c=c, tile_r=tile_r, tiles_per_core=tiles_per_core, rows_valid=rows,
        inv_n_t=1.0 / n_t, w_rot_over_n_r=W_ROT / n_r)

    def in_map(p, i):
        # Clamp so the (rare) fully-out-of-range step on the last core re-reads
        # the last real tile instead of issuing an OOB DMA; its contribution is
        # masked to zero in the kernel (row_off uses the unclamped index).
        return (jnp.minimum(p * tiles_per_core + i, n_tiles - 1), 0)

    out = pl.pallas_call(
        kernel,
        out_shape=jax.ShapeDtypeStruct((_NUM_CORES * 8, _LANE), jnp.float32),
        grid_spec=pltpu.PrefetchScalarGridSpec(
            num_scalar_prefetch=0,
            grid=(_NUM_CORES, tiles_per_core),
            in_specs=[
                pl.BlockSpec((tile_r, _LANE), in_map),
                pl.BlockSpec((tile_r, _LANE), in_map),
            ],
            out_specs=pl.BlockSpec((8, _LANE), lambda p, i: (p, 0)),
            scratch_shapes=[pltpu.VMEM((tile_r, _LANE), jnp.float32)],
        ),
        compiler_params=pltpu.CompilerParams(
            dimension_semantics=("parallel", "arbitrary"),
            vmem_limit_bytes=32 * 1024 * 1024,
        ),
    )(pred2d, tgt2d)

    # (NUM_CORES*8, 128) per-lane partials -> scalar (tiny XLA reduce).
    return jnp.sum(out)


if __name__ == "__main__":
    def ref_loss(p, t):
        l_t = jnp.mean((p[:, :, :3] - t[:, :, :3]) ** 2)
        l_r = jnp.mean((p[:, :, 3:] - t[:, :, 3:]) ** 2)
        return l_t + W_ROT * l_r

    key = jax.random.PRNGKey(0)
    k1, k2, k3, k4 = jax.random.split(key, 4)

    # Small shape implied by the module: (batch, seq, 7) pose vectors.
    B, S, C = 2, 8, 7
    pred = jax.random.normal(k1, (B, S, C), dtype=jnp.float32)
    target = jax.random.normal(k2, (B, S, C), dtype=jnp.float32)
    loss = weighted_loss(pred, target)
    jax.block_until_ready(loss)
    ref = ref_loss(pred, target)
    assert jnp.allclose(loss, ref, rtol=1e-5, atol=1e-5), (loss, ref)

    # Larger shape: exercises the zero-copy (128-divisible) path, multi-tile
    # accumulation, the boundary mask and the 2-way core split.
    B2, S2 = 16, 8192
    pred2 = jax.random.normal(k3, (B2, S2, C), dtype=jnp.float32)
    target2 = jax.random.normal(k4, (B2, S2, C), dtype=jnp.float32)
    loss2 = weighted_loss(pred2, target2)
    jax.block_until_ready(loss2)
    ref2 = ref_loss(pred2, target2)
    assert jnp.allclose(loss2, ref2, rtol=1e-4, atol=1e-4), (loss2, ref2)

    print("KERNEL_OK")
</pallas_src>

<mosaic_0001>
module attributes {stable_mosaic.version = 11 : i64} {
  func.func @_weighted_loss_kernel(%arg0: i32, %arg1: i32, %arg2: memref<56x128xf32, #tpu.memory_space<vmem>>, %arg3: memref<56x128xf32, #tpu.memory_space<vmem>>, %arg4: memref<8x128xf32, #tpu.memory_space<vmem>>, %arg5: memref<56x128xf32, #tpu.memory_space<vmem>>) attributes {dimension_semantics = [#tpu.dimension_semantics<parallel>, #tpu.dimension_semantics<arbitrary>], iteration_bounds = array<i64: 2, 1>, scalar_prefetch = 0 : i64, scratch_operands = 1 : i64, tpu.core_type = #tpu.core_type<tc>, window_params = [{transform_indices = @transform_0, window_bounds = array<i64: 56, 128>}, {transform_indices = @transform_1, window_bounds = array<i64: 56, 128>}, {transform_indices = @transform_2, window_bounds = array<i64: 8, 128>}]} {
    %c0_i32 = arith.constant 0 : i32
    %0 = arith.cmpi eq, %arg1, %c0_i32 : i32
    %1 = arith.extui %0 : i1 to i32
    %c0_i32_0 = arith.constant 0 : i32
    %2 = arith.cmpi ne, %1, %c0_i32_0 : i32
    scf.if %2 {
      %16 = tpu.iota {dimensions = array<i32: 0>} : vector<56x128xi32>
      %17 = tpu.iota {dimensions = array<i32: 1>} : vector<56x128xi32>
      %c128_i32 = arith.constant 128 : i32
      %18 = vector.broadcast %c128_i32 : i32 to vector<56x128xi32>
      %19 = arith.muli %16, %18 : vector<56x128xi32>
      %20 = arith.addi %19, %17 : vector<56x128xi32>
      %c7_i32 = arith.constant 7 : i32
      %c0_i32_8 = arith.constant 0 : i32
      %21 = arith.cmpi eq, %c7_i32, %c0_i32_8 : i32
      %c1_i32_9 = arith.constant 1 : i32
      %22 = arith.select %21, %c1_i32_9, %c7_i32 : i32
      %23 = vector.broadcast %22 : i32 to vector<56x128xi32>
      %24 = arith.remsi %20, %23 : vector<56x128xi32>
      %c0_i32_10 = arith.constant 0 : i32
      %25 = vector.broadcast %c0_i32_10 : i32 to vector<56x128xi32>
      %26 = arith.cmpi ne, %24, %25 : vector<56x128xi32>
      %c0_i32_11 = arith.constant 0 : i32
      %27 = vector.broadcast %c0_i32_11 : i32 to vector<56x128xi32>
      %28 = arith.cmpi slt, %24, %27 : vector<56x128xi32>
      %c0_i32_12 = arith.constant 0 : i32
      %29 = arith.cmpi slt, %22, %c0_i32_12 : i32
      %30 = vector.broadcast %29 : i1 to vector<56x128xi1>
      %31 = vector.broadcast %30 : vector<56x128xi1> to vector<56x128xi1>
      %32 = arith.xori %28, %31 : vector<56x128xi1>
      %33 = arith.andi %32, %26 : vector<56x128xi1>
      %34 = vector.broadcast %22 : i32 to vector<56x128xi32>
      %35 = arith.addi %24, %34 : vector<56x128xi32>
      %36 = arith.select %33, %35, %24 : vector<56x128xi1>, vector<56x128xi32>
      %c3_i32 = arith.constant 3 : i32
      %37 = vector.broadcast %c3_i32 : i32 to vector<56x128xi32>
      %38 = arith.cmpi slt, %36, %37 : vector<56x128xi32>
      %cst = arith.constant 0.020833334 : f32
      %cst_13 = arith.constant 1.562500e+00 : f32
      %39 = vector.broadcast %cst : f32 to vector<56x128xf32>
      %40 = vector.broadcast %cst_13 : f32 to vector<56x128xf32>
      %41 = arith.select %38, %39, %40 : vector<56x128xi1>, vector<56x128xf32>
      %c0_14 = arith.constant 0 : index
      %c0_15 = arith.constant 0 : index
      %42 = vector.load %arg5[%c0_14, %c0_15] : memref<56x128xf32, #tpu.memory_space<vmem>>, vector<56x128xf32>
      tpu.vector_store %arg5[%c0_14, %c0_15], %41 {strides = array<i32>} : memref<56x128xf32, #tpu.memory_space<vmem>>, vector<56x128xf32>,
      %cst_16 = arith.constant 0.000000e+00 : f32
      %43 = vector.broadcast %cst_16 : f32 to vector<8x128xf32>
      %c0_17 = arith.constant 0 : index
      %c0_18 = arith.constant 0 : index
      %44 = vector.load %arg4[%c0_17, %c0_18] : memref<8x128xf32, #tpu.memory_space<vmem>>, vector<8x128xf32>
      tpu.vector_store %arg4[%c0_17, %c0_18], %43 {strides = array<i32>} : memref<8x128xf32, #tpu.memory_space<vmem>>, vector<8x128xf32>,
    } else {
    }
    %c0 = arith.constant 0 : index
    %c0_1 = arith.constant 0 : index
    %3 = vector.load %arg2[%c0, %c0_1] : memref<56x128xf32, #tpu.memory_space<vmem>>, vector<56x128xf32>
    %c0_2 = arith.constant 0 : index
    %c0_3 = arith.constant 0 : index
    %4 = vector.load %arg3[%c0_2, %c0_3] : memref<56x128xf32, #tpu.memory_space<vmem>>, vector<56x128xf32>
    %5 = arith.subf %3, %4 : vector<56x128xf32>
    %c1_i32 = arith.constant 1 : i32
    %6 = arith.muli %arg0, %c1_i32 : i32
    %7 = arith.addi %6, %arg1 : i32
    %c56_i32 = arith.constant 56 : i32
    %8 = arith.muli %7, %c56_i32 : i32
    %c56_i32_4 = arith.constant 56 : i32
    %9 = arith.addi %8, %c56_i32_4 : i32
    %c1_i32_5 = arith.constant 1 : i32
    %10 = arith.cmpi sgt, %9, %c1_i32_5 : i32
    %true = arith.constant true
    %11 = arith.xori %10, %true : i1
    %12 = arith.extui %11 : i1 to i32
    %c0_i32_6 = arith.constant 0 : i32
    %13 = arith.cmpi ne, %12, %c0_i32_6 : i32
    scf.if %13 {
      %16 = arith.mulf %5, %5 : vector<56x128xf32>
      %c0_8 = arith.constant 0 : index
      %c0_9 = arith.constant 0 : index
      %17 = vector.load %arg5[%c0_8, %c0_9] : memref<56x128xf32, #tpu.memory_space<vmem>>, vector<56x128xf32>
      %18 = arith.mulf %16, %17 : vector<56x128xf32>
      %c0_10 = arith.constant 0 : index
      %c0_11 = arith.constant 0 : index
      %19 = vector.load %arg4[%c0_10, %c0_11] : memref<8x128xf32, #tpu.memory_space<vmem>>, vector<8x128xf32>
      %20 = vector.shape_cast %18 : vector<56x128xf32> to vector<7x8x128xf32>
      %cst = arith.constant dense<0.000000e+00> : vector<8x128xf32>
      %21 = vector.multi_reduction <add>, %20, %cst [0] : vector<7x8x128xf32> to vector<8x128xf32>
      %22 = arith.addf %19, %21 : vector<8x128xf32>
      %c0_12 = arith.constant 0 : index
      %c0_13 = arith.constant 0 : index
      %23 = vector.load %arg4[%c0_12, %c0_13] : memref<8x128xf32, #tpu.memory_space<vmem>>, vector<8x128xf32>
      tpu.vector_store %arg4[%c0_12, %c0_13], %22 {strides = array<i32>} : memref<8x128xf32, #tpu.memory_space<vmem>>, vector<8x128xf32>,
    } else {
    }
    %14 = arith.extui %10 : i1 to i32
    %c0_i32_7 = arith.constant 0 : i32
    %15 = arith.cmpi ne, %14, %c0_i32_7 : i32
    scf.if %15 {
      %16 = tpu.iota {dimensions = array<i32: 0>} : vector<56x1xi32>
      %17 = vector.broadcast %8 : i32 to vector<56x1xi32>
      %18 = arith.addi %16, %17 : vector<56x1xi32>
      %c1_i32_8 = arith.constant 1 : i32
      %19 = vector.broadcast %c1_i32_8 : i32 to vector<56x1xi32>
      %20 = arith.cmpi slt, %18, %19 : vector<56x1xi32>
      %cst = arith.constant 0.000000e+00 : f32
      %21 = vector.shape_cast %20 : vector<56x1xi1> to vector<56x1xi1>
      %22 = vector.broadcast %21 : vector<56x1xi1> to vector<56x128xi1>
      %23 = vector.broadcast %cst : f32 to vector<56x128xf32>
      %24 = arith.select %22, %5, %23 : vector<56x128xi1>, vector<56x128xf32>
      %25 = arith.mulf %24, %24 : vector<56x128xf32>
      %c0_9 = arith.constant 0 : index
      %c0_10 = arith.constant 0 : index
      %26 = vector.load %arg5[%c0_9, %c0_10] : memref<56x128xf32, #tpu.memory_space<vmem>>, vector<56x128xf32>
      %27 = arith.mulf %25, %26 : vector<56x128xf32>
      %c0_11 = arith.constant 0 : index
      %c0_12 = arith.constant 0 : index
      %28 = vector.load %arg4[%c0_11, %c0_12] : memref<8x128xf32, #tpu.memory_space<vmem>>, vector<8x128xf32>
      %29 = vector.shape_cast %27 : vector<56x128xf32> to vector<7x8x128xf32>
      %cst_13 = arith.constant dense<0.000000e+00> : vector<8x128xf32>
      %30 = vector.multi_reduction <add>, %29, %cst_13 [0] : vector<7x8x128xf32> to vector<8x128xf32>
      %31 = arith.addf %28, %30 : vector<8x128xf32>
      %c0_14 = arith.constant 0 : index
      %c0_15 = arith.constant 0 : index
      %32 = vector.load %arg4[%c0_14, %c0_15] : memref<8x128xf32, #tpu.memory_space<vmem>>, vector<8x128xf32>
      tpu.vector_store %arg4[%c0_14, %c0_15], %31 {strides = array<i32>} : memref<8x128xf32, #tpu.memory_space<vmem>>, vector<8x128xf32>,
    } else {
    }
    return
  }
  func.func @transform_0(%arg0: i32, %arg1: i32) -> (i32, i32) {
    %c1_i32 = arith.constant 1 : i32
    %0 = arith.muli %arg0, %c1_i32 : i32
    %1 = arith.addi %0, %arg1 : i32
    %c0_i32 = arith.constant 0 : i32
    %2 = arith.minsi %1, %c0_i32 : i32
    %c0_i32_0 = arith.constant 0 : i32
    %c0_i32_1 = arith.constant 0 : i32
    return %2, %c0_i32_0 : i32, i32
  }
  func.func @transform_1(%arg0: i32, %arg1: i32) -> (i32, i32) {
    %c1_i32 = arith.constant 1 : i32
    %0 = arith.muli %arg0, %c1_i32 : i32
    %1 = arith.addi %0, %arg1 : i32
    %c0_i32 = arith.constant 0 : i32
    %2 = arith.minsi %1, %c0_i32 : i32
    %c0_i32_0 = arith.constant 0 : i32
    %c0_i32_1 = arith.constant 0 : i32
    return %2, %c0_i32_0 : i32, i32
  }
  func.func @transform_2(%arg0: i32, %arg1: i32) -> (i32, i32) {
    %c0_i32 = arith.constant 0 : i32
    %c0_i32_0 = arith.constant 0 : i32
    return %arg0, %c0_i32 : i32, i32
  }
}

</mosaic_0001>

<llo_original>
// kernel: tpu_custom_call.1
$region0: #{tpu_custom_call.1}
  #allocation0 [shape = 'u32[]', space=smem, size = 0x4, offset = 0x4, fixed_abs, tag = 'smem constant byte address 0x4 - core index']
  #allocation1 [shape = 'u32[144,128]{1,0:T(1,128)}', space=vmem, size = 0x12000, scoped, tag = 'internal scratch']
  #allocation2 [shape = 'f32[56,128]{1,0:T(8,128)}', space=vmem, size = 0x7000, scoped, tag = 'scratch operand']
  %s0 = inlined_call_operand.hbm [shape: f32[1,128], index: 0, kind: input, shape index: {}]
  %s1 = inlined_call_operand.vmem [shape: f32[1,128], index: 1, kind: input, shape index: {}]
  %s2 = inlined_call_operand.hbm [shape: f32[16,128], index: 2, kind: output, shape index: {}]
  %s3 = sld [smem:[#allocation0]]
  $region57: #{tpu_custom_call.1} parent=0
    _
  %s5 = ssub.s32 1, %s3
  %s6 = scalar_select 0, %s5, %s3
  $region1: #{tpu_custom_call.1} parent=0
    #allocation3 [shape = 'u8[57344]{0}', space=vmem, size = 0xe000, scoped, tag = 'input window, operand 0']
    #allocation4 [shape = 's32[2]{0}', space=sflag, size = 0x8, scoped, tag = 'scoped memory for tpu_custom_call.1']
    #allocation5 [shape = 's32[2]{0}', space=sflag, size = 0x8, scoped, tag = 'scoped memory for tpu_custom_call.1']
    #allocation6 [shape = 'u8[8192]{0}', space=vmem, size = 0x2000, scoped, tag = 'output window, operand 0']
    %7 = vsyncpa [#allocation4], 0
    %s8 = scalar_lea.sflag [#allocation4], 1
    %9 = vsyncpa %s8, 0
    %10 = vsyncpa [#allocation5], 0
    %s11 = scalar_lea.sflag [#allocation5], 1
    %12 = vsyncpa %s11, 0
    loop: start=0, step=1, limit=4
    $region2: #{tpu_custom_call.1} parent=1 // loop_pre_header
      _
    $region3: #{tpu_custom_call.1} parent=1 // loop_header
      %s14 = sphi 0, %s18
      %p15 = scmp.ge.s32.totalorder %s14, 4
      %s21 = sphi 0, %s33
      %s22 = sphi 0, %s29
      %s23 = sphi 0, %s21
      %s24 = sphi 0, %s22
      %s25 = sphi 0, %s23
      %s26 = sphi 0, %s24
      %s42 = sphi 0, %s44
      %s45 = sphi 0, %s42
      %s46 = sphi 0, %s45
      %s62 = sphi 0, %s46
      %s74 = sphi 0, %s76
      %s77 = sphi 0, %s74
      %s78 = sphi 0, %s77
      %s94 = sphi 0, %s78
      %s100 = sphi 0, %s102
      %s103 = sphi 0, %s100
      %s104 = sphi 0, %s103
      %s120 = sphi 0, %s104
    $region4: #{tpu_custom_call.1} parent=1 // loop_header_branch
      %17 = sbr.rel (%p15) target = $region8
    $region5: #{tpu_custom_call.1} parent=1 // loop_body
      %s19 = ssub.s32 %s14, 1
      %s20 = ssub.s32 %s14, 2
      %s27 = sadd.s32 1, %s22
      %p28 = scmp.ge.s32.totalorder %s27, 1
      %s29 = scalar_select %p28, 0, %s27
      %s30 = sadd.s32 1, %s21
      %s31 = scalar_select %p28, %s30, %s21
      %p32 = scmp.ge.s32.totalorder %s31, 2
      %s33 = scalar_select %p32, 0, %s31
      %s34 = sadd.s32 %s21, %s22
      %p35 = scmp.lt.s32.totalorder %s34, 0
      %s36 = scalar_select %p35, %s34, 0
      %s37 = sadd.s32 %s33, %s29
      %p38 = scmp.lt.s32.totalorder %s37, 0
      %s39 = scalar_select %p38, %s37, 0
      %s40 = ssub.s32 %s36, %s39
      %p41 = scmp.eq.s32.totalorder %s40, 0
      %s43 = sadd.s32 %s42, 1
      %s44 = scalar_select %p41, %s42, %s43
      %p47 = pneg %p41
      %p48 = scmp.eq.s32.totalorder %s14, 1
      %p49 = por %p47, %p48
      %p50 = scmp.ne.s32.totalorder %s42, %s45
      %p51 = scmp.eq.s32.totalorder %s14, 0
      %p52 = por %p50, %p51
      %p53 = scmp.ne.s32.totalorder %s42, %s45
      %p54 = scmp.eq.s32.totalorder %s19, 1
      %p55 = por %p53, %p54
      %p56 = scmp.ne.s32.totalorder %s45, %s46
      %p57 = scmp.eq.s32.totalorder %s19, 0
      %p58 = por %p56, %p57
      %p59 = scmp.ne.s32.totalorder %s45, %s46
      %p60 = scmp.eq.s32.totalorder %s20, 1
      %p61 = por %p59, %p60
      %p63 = scmp.ne.s32.totalorder %s46, %s62
      %p64 = scmp.eq.s32.totalorder %s20, 0
      %p65 = por %p63, %p64
      %s66 = sadd.s32 %s21, %s22
      %p67 = scmp.lt.s32.totalorder %s66, 0
      %s68 = scalar_select %p67, %s66, 0
      %s69 = sadd.s32 %s33, %s29
      %p70 = scmp.lt.s32.totalorder %s69, 0
      %s71 = scalar_select %p70, %s69, 0
      %s72 = ssub.s32 %s68, %s71
      %p73 = scmp.eq.s32.totalorder %s72, 0
      %s75 = sadd.s32 %s74, 1
      %s76 = scalar_select %p73, %s74, %s75
      %p79 = pneg %p73
      %p80 = scmp.eq.s32.totalorder %s14, 1
      %p81 = por %p79, %p80
      %p82 = scmp.ne.s32.totalorder %s74, %s77
      %p83 = scmp.eq.s32.totalorder %s14, 0
      %p84 = por %p82, %p83
      %p85 = scmp.ne.s32.totalorder %s74, %s77
      %p86 = scmp.eq.s32.totalorder %s19, 1
      %p87 = por %p85, %p86
      %p88 = scmp.ne.s32.totalorder %s77, %s78
      %p89 = scmp.eq.s32.totalorder %s19, 0
      %p90 = por %p88, %p89
      %p91 = scmp.ne.s32.totalorder %s77, %s78
      %p92 = scmp.eq.s32.totalorder %s20, 1
      %p93 = por %p91, %p92
      %p95 = scmp.ne.s32.totalorder %s78, %s94
      %p96 = scmp.eq.s32.totalorder %s20, 0
      %p97 = por %p95, %p96
      %s98 = ssub.s32 %s21, %s33
      %p99 = scmp.eq.s32.totalorder %s98, 0
      %s101 = sadd.s32 %s100, 1
      %s102 = scalar_select %p99, %s100, %s101
      %p105 = pneg %p99
      %p106 = scmp.eq.s32.totalorder %s14, 1
      %p107 = por %p105, %p106
      %p108 = scmp.ne.s32.totalorder %s100, %s103
      %p109 = scmp.eq.s32.totalorder %s14, 0
      %p110 = por %p108, %p109
      %p111 = scmp.ne.s32.totalorder %s100, %s103
      %p112 = scmp.eq.s32.totalorder %s19, 1
      %p113 = por %p111, %p112
      %p114 = scmp.ne.s32.totalorder %s103, %s104
      %p115 = scmp.eq.s32.totalorder %s19, 0
      %p116 = por %p114, %p115
      %p117 = scmp.ne.s32.totalorder %s103, %s104
      %p118 = scmp.eq.s32.totalorder %s20, 1
      %p119 = por %p117, %p118
      %p121 = scmp.ne.s32.totalorder %s104, %s120
      %p122 = scmp.eq.s32.totalorder %s20, 0
      %p123 = por %p121, %p122
      %p124 = scmp.le.s32.totalorder 1, %s14
      %p125 = scmp.lt.s32.totalorder %s14, 3
      %p126 = pnand %p124, %p125
      %p127 = pneg %p126
      // Predicated region
      $region9: #{tpu_custom_call.1} parent=5 // pred_check
        _
      $region10: #{tpu_custom_call.1} parent=5 // pred_check_branch
        %129 = sbr.rel (%p126) target = $region12
      $region11: #{tpu_custom_call.1} parent=5 // pred_region
        %s130 = ssub.s32 %s14, 1
      $region12: #{tpu_custom_call.1} parent=5 // pred_fallthru
        _
      %p131 = scmp.lt.s32.totalorder %s14, 2
      // Predicated region
      $region13: #{tpu_custom_call.1} parent=5 // pred_check
        %p132 = pneg %p131
      $region14: #{tpu_custom_call.1} parent=5 // pred_check_branch
        %134 = sbr.rel (%p132) target = $region16
      $region15: #{tpu_custom_call.1} parent=5 // pred_region
        // Predicated region
        $region17: #{tpu_custom_call.1} parent=15 // pred_check
          %p135 = pneg %p52
        $region18: #{tpu_custom_call.1} parent=15 // pred_check_branch
          %137 = sbr.rel (%p135) target = $region20
        $region19: #{tpu_custom_call.1} parent=15 // pred_region
          %s138 = sand.u32 %s42, 1
          %s139 = scalar_lea.sflag [#allocation4], %s138
          %s140 = sand.u32 %s42, 1
          %s141 = smul.addr %s140, 56
          %s142 = scalar_lea.vmem [#allocation3], %s141
          %s143 = sadd.s32 %s21, %s22
          %p144 = scmp.lt.s32.totalorder %s143, 0
          %s145 = scalar_select %p144, %s143, 0
          %s146 = smul.u32 56, %s145
          %s147 = ssub.s32 1, %s146
          %s148 = smul.u32 16, %s147
          %s150 = ssub.s32 896, %s148
          %151 = vsyncadd %s139, %s150
          %p152 = scmp.ne.s32.totalorder 0, %s148
          %s153 = smul.addr %s146, 16
          %s154 = scalar_lea.hbm %s0, %s153
          %s155 = sshll.u32 %s142, 4
          %s156 = int_to_ptr.vmem [resolvable:$true] %s155
          %s157 = sshll.u32 %s147, 4
          %161 = dma.hbm_to_vmem [thread:$0]  (%p152), %s154, %s157, %s156, %s139, 16, 16, 1
        $region20: #{tpu_custom_call.1} parent=15 // pred_fallthru
          _
        // Predicated region
        $region21: #{tpu_custom_call.1} parent=15 // pred_check
          %p162 = pneg %p84
        $region22: #{tpu_custom_call.1} parent=15 // pred_check_branch
          %164 = sbr.rel (%p162) target = $region24
        $region23: #{tpu_custom_call.1} parent=15 // pred_region
          %s165 = sadd.s32 %s21, %s22
          %p166 = scmp.lt.s32.totalorder %s165, 0
          %s167 = scalar_select %p166, %s165, 0
          %s168 = smul.u32 56, %s167
          %s169 = ssub.s32 1, %s168
          %s170 = smul.u32 16, %s169
          %p171 = scmp.lt.s32.totalorder %s168, 0
          %s172 = scalar_select %p171, %s168, 0
          %s173 = scalar_lea.vmem %s1, %s172
          %s174 = sadd.s32 %s21, %s22
          %p175 = scmp.lt.s32.totalorder %s174, 0
          %s176 = scalar_select %p175, %s174, 0
          %s177 = smul.u32 56, %s176
          %s178 = ssub.s32 1, %s177
          %s179 = smul.u32 16, %s178
        $region24: #{tpu_custom_call.1} parent=15 // pred_fallthru
          _
      $region16: #{tpu_custom_call.1} parent=5 // pred_fallthru
        _
      %p180 = scmp.le.s32.totalorder 1, %s14
      %p181 = scmp.lt.s32.totalorder %s14, 3
      %p182 = pnand %p180, %p181
      %p183 = pneg %p182
      // Predicated region
      $region25: #{tpu_custom_call.1} parent=5 // pred_check
        _
      $region26: #{tpu_custom_call.1} parent=5 // pred_check_branch
        %185 = sbr.rel (%p182) target = $region28
      $region27: #{tpu_custom_call.1} parent=5 // pred_region
        %s186 = ssub.s32 %s14, 1
        %s187 = sand.u32 %s45, 1
        %s188 = scalar_lea.sflag [#allocation4], %s187
        %s189 = sand.u32 %s45, 1
        %s190 = smul.addr %s189, 56
        %s191 = scalar_lea.vmem [#allocation3], %s190
        // Predicated region
        $region29: #{tpu_custom_call.1} parent=27 // pred_check
          %p192 = pneg %p58
        $region30: #{tpu_custom_call.1} parent=27 // pred_check_branch
          %194 = sbr.rel (%p192) target = $region32
        $region31: #{tpu_custom_call.1} parent=27 // pred_region
          %195 = dma.done %s188, 896
        $region32: #{tpu_custom_call.1} parent=27 // pred_fallthru
          _
        %s196 = sand.u32 %s45, 1
        %s197 = scalar_lea.sflag [#allocation4], %s196
        %s198 = sand.u32 %s45, 1
        %s199 = smul.addr %s198, 56
        %s200 = scalar_lea.vmem [#allocation3], %s199
        %p201 = pneg %p58
        %p202 = pneg %p55
        %s203 = sadd.s32 %s23, %s24
        %p204 = scmp.lt.s32.totalorder %s203, 0
        %s205 = scalar_select %p204, %s203, 0
        %s206 = smul.u32 56, %s205
        %s207 = ssub.s32 1, %s206
        %s208 = smul.u32 16, %s207
        %p209 = scmp.lt.s32.totalorder %s206, 0
        %s210 = scalar_select %p209, %s206, 0
        %s211 = scalar_lea.vmem %s1, %s210
        %p212 = pneg %p90
        %p213 = pneg %p87
        %p214 = pneg %p116
        %p215 = pneg %p113
        %s216 = sand.u32 %s103, 1
        %s217 = scalar_lea.sflag [#allocation5], %s216
        %s218 = sand.u32 %s103, 1
        %s219 = smul.addr %s218, 8
        %s220 = scalar_lea.vmem [#allocation6], %s219
        %s221 = sadd.s32 %s23, %s24
        %p222 = scmp.lt.s32.totalorder %s221, 0
        %s223 = scalar_select %p222, %s221, 0
        %s224 = smul.u32 56, %s223
        %s225 = ssub.s32 1, %s224
        %s226 = smul.u32 16, %s225
        %s227 = sadd.s32 %s23, %s24
        %p228 = scmp.lt.s32.totalorder %s227, 0
        %s229 = scalar_select %p228, %s227, 0
        %s230 = smul.u32 56, %s229
        %s231 = ssub.s32 1, %s230
        %s232 = smul.u32 16, %s231
        %p233 = scmp.lt.s32.totalorder %s230, 0
        %s234 = scalar_select %p233, %s230, 0
        %s235 = scalar_lea.vmem %s1, %s234
        %s236 = sadd.s32 %s23, %s24
        %p237 = scmp.lt.s32.totalorder %s236, 0
        %s238 = scalar_select %p237, %s236, 0
        %s239 = smul.u32 56, %s238
        %s240 = ssub.s32 1, %s239
        %s241 = smul.u32 16, %s240
        %p242 = scmp.eq.s32.totalorder %s24, 0
        // Predicated region
        $region33: #{tpu_custom_call.1} parent=27 // pred_check
          %p243 = pneg %p242
        $region34: #{tpu_custom_call.1} parent=27 // pred_check_branch
          %245 = sbr.rel (%p243) target = $region36
        $region35: #{tpu_custom_call.1} parent=27 // pred_region
          %v246 = vlaneseq
          %v247 = vshrl.u32 %v246, 7
          %v248 = vadd.s32 %v247, 8
          %v249 = vadd.s32 %v247, 16
          %v250 = vadd.s32 %v247, 24
          %v251 = vadd.s32 %v247, 32
          %v252 = vadd.s32 %v247, 40
          %v253 = vadd.s32 %v247, 48
          %v254 = vlaneseq
          %v255 = vand.u32 %v254, 127
          %v256 = vmul.u32 %v247, 128
          %v257 = vmul.u32 %v248, 128
          %v258 = vmul.u32 %v249, 128
          %v259 = vmul.u32 %v250, 128
          %v260 = vmul.u32 %v251, 128
          %v261 = vmul.u32 %v252, 128
          %v262 = vmul.u32 %v253, 128
          %v263 = vadd.s32 %v256, %v255
          %v264 = vadd.s32 %v257, %v255
          %v265 = vadd.s32 %v258, %v255
          %v266 = vadd.s32 %v259, %v255
          %v267 = vadd.s32 %v260, %v255
          %v268 = vadd.s32 %v261, %v255
          %v269 = vadd.s32 %v262, %v255
          %vm270 = vcmp.lt.s32.totalorder %v263, 0
          %v271 = vsub.s32 0, %v263
          %v272 = vsel %vm270, %v271, %v263
          %v273 = vmul.u32.u64.compose %v272, 2454267026
          %v274 = vextract.low.u32 %v273
          %v275 = vextract.high.u32 %v273
          %vm276 = vc.u32 %v274, 2454267026
          %v277 = vsel %vm276, 1, 0
          %v278 = vadd.s32 %v275, %v277
          %v279 = vshrl.u32 %v278, 2
          %v280 = vmul.u32 %v279, 7
          %v281 = vsub.s32 %v272, %v280
          %v282 = vsub.s32 0, %v281
          %v283 = vsel %vm270, %v282, %v281
          %vm284 = vcmp.lt.s32.totalorder %v264, 0
          %v285 = vsub.s32 0, %v264
          %v286 = vsel %vm284, %v285, %v264
          %v287 = vmul.u32.u64.compose %v286, 2454267026
          %v288 = vextract.low.u32 %v287
          %v289 = vextract.high.u32 %v287
          %vm290 = vc.u32 %v288, 2454267026
          %v291 = vsel %vm290, 1, 0
          %v292 = vadd.s32 %v289, %v291
          %v293 = vshrl.u32 %v292, 2
          %v294 = vmul.u32 %v293, 7
          %v295 = vsub.s32 %v286, %v294
          %v296 = vsub.s32 0, %v295
          %v297 = vsel %vm284, %v296, %v295
          %vm298 = vcmp.lt.s32.totalorder %v265, 0
          %v299 = vsub.s32 0, %v265
          %v300 = vsel %vm298, %v299, %v265
          %v301 = vmul.u32.u64.compose %v300, 2454267026
          %v302 = vextract.low.u32 %v301
          %v303 = vextract.high.u32 %v301
          %vm304 = vc.u32 %v302, 2454267026
          %v305 = vsel %vm304, 1, 0
          %v306 = vadd.s32 %v303, %v305
          %v307 = vshrl.u32 %v306, 2
          %v308 = vmul.u32 %v307, 7
          %v309 = vsub.s32 %v300, %v308
          %v310 = vsub.s32 0, %v309
          %v311 = vsel %vm298, %v310, %v309
          %vm312 = vcmp.lt.s32.totalorder %v266, 0
          %v313 = vsub.s32 0, %v266
          %v314 = vsel %vm312, %v313, %v266
          %v315 = vmul.u32.u64.compose %v314, 2454267026
          %v316 = vextract.low.u32 %v315
          %v317 = vextract.high.u32 %v315
          %vm318 = vc.u32 %v316, 2454267026
          %v319 = vsel %vm318, 1, 0
          %v320 = vadd.s32 %v317, %v319
          %v321 = vshrl.u32 %v320, 2
          %v322 = vmul.u32 %v321, 7
          %v323 = vsub.s32 %v314, %v322
          %v324 = vsub.s32 0, %v323
          %v325 = vsel %vm312, %v324, %v323
          %vm326 = vcmp.lt.s32.totalorder %v267, 0
          %v327 = vsub.s32 0, %v267
          %v328 = vsel %vm326, %v327, %v267
          %v329 = vmul.u32.u64.compose %v328, 2454267026
          %v330 = vextract.low.u32 %v329
          %v331 = vextract.high.u32 %v329
          %vm332 = vc.u32 %v330, 2454267026
          %v333 = vsel %vm332, 1, 0
          %v334 = vadd.s32 %v331, %v333
          %v335 = vshrl.u32 %v334, 2
          %v336 = vmul.u32 %v335, 7
          %v337 = vsub.s32 %v328, %v336
          %v338 = vsub.s32 0, %v337
          %v339 = vsel %vm326, %v338, %v337
          %vm340 = vcmp.lt.s32.totalorder %v268, 0
          %v341 = vsub.s32 0, %v268
          %v342 = vsel %vm340, %v341, %v268
          %v343 = vmul.u32.u64.compose %v342, 2454267026
          %v344 = vextract.low.u32 %v343
          %v345 = vextract.high.u32 %v343
          %vm346 = vc.u32 %v344, 2454267026
          %v347 = vsel %vm346, 1, 0
          %v348 = vadd.s32 %v345, %v347
          %v349 = vshrl.u32 %v348, 2
          %v350 = vmul.u32 %v349, 7
          %v351 = vsub.s32 %v342, %v350
          %v352 = vsub.s32 0, %v351
          %v353 = vsel %vm340, %v352, %v351
          %vm354 = vcmp.lt.s32.totalorder %v269, 0
          %v355 = vsub.s32 0, %v269
          %v356 = vsel %vm354, %v355, %v269
          %v357 = vmul.u32.u64.compose %v356, 2454267026
          %v358 = vextract.low.u32 %v357
          %v359 = vextract.high.u32 %v357
          %vm360 = vc.u32 %v358, 2454267026
          %v361 = vsel %vm360, 1, 0
          %v362 = vadd.s32 %v359, %v361
          %v363 = vshrl.u32 %v362, 2
          %v364 = vmul.u32 %v363, 7
          %v365 = vsub.s32 %v356, %v364
          %v366 = vsub.s32 0, %v365
          %v367 = vsel %vm354, %v366, %v365
          %vm368 = vcmp.ne.s32.totalorder %v283, 0
          %vm369 = vcmp.ne.s32.totalorder %v297, 0
          %vm370 = vcmp.ne.s32.totalorder %v311, 0
          %vm371 = vcmp.ne.s32.totalorder %v325, 0
          %vm372 = vcmp.ne.s32.totalorder %v339, 0
          %vm373 = vcmp.ne.s32.totalorder %v353, 0
          %vm374 = vcmp.ne.s32.totalorder %v367, 0
          %vm375 = vcmp.lt.s32.totalorder %v283, 0
          %vm376 = vcmp.lt.s32.totalorder %v297, 0
          %vm377 = vcmp.lt.s32.totalorder %v311, 0
          %vm378 = vcmp.lt.s32.totalorder %v325, 0
          %vm379 = vcmp.lt.s32.totalorder %v339, 0
          %vm380 = vcmp.lt.s32.totalorder %v353, 0
          %vm381 = vcmp.lt.s32.totalorder %v367, 0
          %vm382 = vmand %vm375, %vm368
          %vm383 = vmand %vm376, %vm369
          %vm384 = vmand %vm377, %vm370
          %vm385 = vmand %vm378, %vm371
          %vm386 = vmand %vm379, %vm372
          %vm387 = vmand %vm380, %vm373
          %vm388 = vmand %vm381, %vm374
          %v389 = vadd.s32 %v283, 7
          %v390 = vadd.s32 %v297, 7
          %v391 = vadd.s32 %v311, 7
          %v392 = vadd.s32 %v325, 7
          %v393 = vadd.s32 %v339, 7
          %v394 = vadd.s32 %v353, 7
          %v395 = vadd.s32 %v367, 7
          %v396 = vsel %vm382, %v389, %v283
          %v397 = vsel %vm383, %v390, %v297
          %v398 = vsel %vm384, %v391, %v311
          %v399 = vsel %vm385, %v392, %v325
          %v400 = vsel %vm386, %v393, %v339
          %v401 = vsel %vm387, %v394, %v353
          %v402 = vsel %vm388, %v395, %v367
          %vm403 = vcmp.lt.s32.totalorder %v396, 3
          %vm404 = vcmp.lt.s32.totalorder %v397, 3
          %vm405 = vcmp.lt.s32.totalorder %v398, 3
          %vm406 = vcmp.lt.s32.totalorder %v399, 3
          %vm407 = vcmp.lt.s32.totalorder %v400, 3
          %vm408 = vcmp.lt.s32.totalorder %v401, 3
          %vm409 = vcmp.lt.s32.totalorder %v402, 3
          %v410 = vsel %vm403, 0.020833334, 1.5625
          %v411 = vsel %vm404, 0.020833334, 1.5625
          %v412 = vsel %vm405, 0.020833334, 1.5625
          %v413 = vsel %vm406, 0.020833334, 1.5625
          %v414 = vsel %vm407, 0.020833334, 1.5625
          %v415 = vsel %vm408, 0.020833334, 1.5625
          %v416 = vsel %vm409, 0.020833334, 1.5625
          %417 = vst [vmem:[#allocation2] sm:$0xff] %v410
          %418 = vst [vmem:[#allocation2 + $0x8] sm:$0xff] %v411
          %419 = vst [vmem:[#allocation2 + $0x10] sm:$0xff] %v412
          %420 = vst [vmem:[#allocation2 + $0x18] sm:$0xff] %v413
          %421 = vst [vmem:[#allocation2 + $0x20] sm:$0xff] %v414
          %422 = vst [vmem:[#allocation2 + $0x28] sm:$0xff] %v415
          %423 = vst [vmem:[#allocation2 + $0x30] sm:$0xff] %v416
          %424 = vst [vmem:[%s220] sm:$0xff] 0.0
        $region36: #{tpu_custom_call.1} parent=27 // pred_fallthru
          _
        %v425 = vld [vmem:[%s191] sm:$0xff]
        %v426 = vld [vmem:[%s191 + $0x8] sm:$0xff]
        %v427 = vld [vmem:[%s191 + $0x10] sm:$0xff]
        %v428 = vld [vmem:[%s191 + $0x18] sm:$0xff]
        %v429 = vld [vmem:[%s191 + $0x20] sm:$0xff]
        %v430 = vld [vmem:[%s191 + $0x28] sm:$0xff]
        %v431 = vld [vmem:[%s191 + $0x30] sm:$0xff]
        %v432 = vld [vmem:[%s235] sm:$0xff]
        %v433 = vld [vmem:[%s235 + $0x8] sm:$0xff]
        %v434 = vld [vmem:[%s235 + $0x10] sm:$0xff]
        %v435 = vld [vmem:[%s235 + $0x18] sm:$0xff]
        %v436 = vld [vmem:[%s235 + $0x20] sm:$0xff]
        %v437 = vld [vmem:[%s235 + $0x28] sm:$0xff]
        %v438 = vld [vmem:[%s235 + $0x30] sm:$0xff]
        %v439 = vsub.f32 %v425, %v432
        %v440 = vsub.f32 %v426, %v433
        %v441 = vsub.f32 %v427, %v434
        %v442 = vsub.f32 %v428, %v435
        %v443 = vsub.f32 %v429, %v436
        %v444 = vsub.f32 %v430, %v437
        %v445 = vsub.f32 %v431, %v438
        %s446 = sadd.s32 %s23, %s24
        %s447 = smul.u32 %s446, 56
        %s448 = sadd.s32 %s447, 56
        %p449 = scmp.gt.s32.totalorder %s448, 1
        %p450 = scmp.le.s32.totalorder %s448, 1
        // Predicated region
        $region37: #{tpu_custom_call.1} parent=27 // pred_check
          %p451 = pneg %p450
        $region38: #{tpu_custom_call.1} parent=27 // pred_check_branch
          %453 = sbr.rel (%p451) target = $region40
        $region39: #{tpu_custom_call.1} parent=27 // pred_region
          %v454 = vmul.f32 %v439, %v439
          %v455 = vmul.f32 %v440, %v440
          %v456 = vmul.f32 %v441, %v441
          %v457 = vmul.f32 %v442, %v442
          %v458 = vmul.f32 %v443, %v443
          %v459 = vmul.f32 %v444, %v444
          %v460 = vmul.f32 %v445, %v445
          %v461 = vld [vmem:[#allocation2] sm:$0xff]
          %v462 = vld [vmem:[#allocation2 + $0x8] sm:$0xff]
          %v463 = vld [vmem:[#allocation2 + $0x10] sm:$0xff]
          %v464 = vld [vmem:[#allocation2 + $0x18] sm:$0xff]
          %v465 = vld [vmem:[#allocation2 + $0x20] sm:$0xff]
          %v466 = vld [vmem:[#allocation2 + $0x28] sm:$0xff]
          %v467 = vld [vmem:[#allocation2 + $0x30] sm:$0xff]
          %v468 = vmul.f32 %v454, %v461
          %v469 = vmul.f32 %v455, %v462
          %v470 = vmul.f32 %v456, %v463
          %v471 = vmul.f32 %v457, %v464
          %v472 = vmul.f32 %v458, %v465
          %v473 = vmul.f32 %v459, %v466
          %v474 = vmul.f32 %v460, %v467
          %v475 = vld [vmem:[%s220] sm:$0xff]
          %v476 = vadd.f32 %v468, %v469
          %v477 = vadd.f32 %v476, %v470
          %v478 = vadd.f32 %v477, %v471
          %v479 = vadd.f32 %v478, %v472
          %v480 = vadd.f32 %v479, %v473
          %v481 = vadd.f32 %v480, %v474
          %v482 = vadd.f32 %v475, %v481
          %483 = vst [vmem:[%s220] sm:$0xff] %v482
        $region40: #{tpu_custom_call.1} parent=27 // pred_fallthru
          _
        // Predicated region
        $region41: #{tpu_custom_call.1} parent=27 // pred_check
          %p484 = pneg %p449
        $region42: #{tpu_custom_call.1} parent=27 // pred_check_branch
          %486 = sbr.rel (%p484) target = $region44
        $region43: #{tpu_custom_call.1} parent=27 // pred_region
          %v487 = vlaneseq
          %v488 = vshrl.u32 %v487, 7
          %v489 = vadd.s32 %v488, 8
          %v490 = vadd.s32 %v488, 16
          %v491 = vadd.s32 %v488, 24
          %v492 = vadd.s32 %v488, 32
          %v493 = vadd.s32 %v488, 40
          %v494 = vadd.s32 %v488, 48
          %v495 = vstv %s447
          %v496 = vadd.s32 %v488, %v495
          %v497 = vadd.s32 %v489, %v495
          %v498 = vadd.s32 %v490, %v495
          %v499 = vadd.s32 %v491, %v495
          %v500 = vadd.s32 %v492, %v495
          %v501 = vadd.s32 %v493, %v495
          %v502 = vadd.s32 %v494, %v495
          %vm503 = vcmp.lt.s32.totalorder %v496, 1
          %vm504 = vcmp.lt.s32.totalorder %v497, 1
          %vm505 = vcmp.lt.s32.totalorder %v498, 1
          %vm506 = vcmp.lt.s32.totalorder %v499, 1
          %vm507 = vcmp.lt.s32.totalorder %v500, 1
          %vm508 = vcmp.lt.s32.totalorder %v501, 1
          %vm509 = vcmp.lt.s32.totalorder %v502, 1
          %v510 = vsel %vm503, 1, 0
          %v511 = vsel %vm504, 1, 0
          %v512 = vsel %vm505, 1, 0
          %v513 = vsel %vm506, 1, 0
          %v514 = vsel %vm507, 1, 0
          %v515 = vsel %vm508, 1, 0
          %v516 = vsel %vm509, 1, 0
          %vm517 = vcmp.eq.s32.totalorder %v510, 1
          %vm518 = vcmp.eq.s32.totalorder %v511, 1
          %vm519 = vcmp.eq.s32.totalorder %v512, 1
          %vm520 = vcmp.eq.s32.totalorder %v513, 1
          %vm521 = vcmp.eq.s32.totalorder %v514, 1
          %vm522 = vcmp.eq.s32.totalorder %v515, 1
          %vm523 = vcmp.eq.s32.totalorder %v516, 1
          %v524 = vsel %vm517, %v439, 0.0
          %v525 = vsel %vm518, %v440, 0.0
          %v526 = vsel %vm519, %v441, 0.0
          %v527 = vsel %vm520, %v442, 0.0
          %v528 = vsel %vm521, %v443, 0.0
          %v529 = vsel %vm522, %v444, 0.0
          %v530 = vsel %vm523, %v445, 0.0
          %v531 = vmul.f32 %v524, %v524
          %v532 = vmul.f32 %v525, %v525
          %v533 = vmul.f32 %v526, %v526
          %v534 = vmul.f32 %v527, %v527
          %v535 = vmul.f32 %v528, %v528
          %v536 = vmul.f32 %v529, %v529
          %v537 = vmul.f32 %v530, %v530
          %v538 = vld [vmem:[#allocation2] sm:$0xff]
          %v539 = vld [vmem:[#allocation2 + $0x8] sm:$0xff]
          %v540 = vld [vmem:[#allocation2 + $0x10] sm:$0xff]
          %v541 = vld [vmem:[#allocation2 + $0x18] sm:$0xff]
          %v542 = vld [vmem:[#allocation2 + $0x20] sm:$0xff]
          %v543 = vld [vmem:[#allocation2 + $0x28] sm:$0xff]
          %v544 = vld [vmem:[#allocation2 + $0x30] sm:$0xff]
          %v545 = vmul.f32 %v531, %v538
          %v546 = vmul.f32 %v532, %v539
          %v547 = vmul.f32 %v533, %v540
          %v548 = vmul.f32 %v534, %v541
          %v549 = vmul.f32 %v535, %v542
          %v550 = vmul.f32 %v536, %v543
          %v551 = vmul.f32 %v537, %v544
          %v552 = vld [vmem:[%s220] sm:$0xff]
          %v553 = vadd.f32 %v545, %v546
          %v554 = vadd.f32 %v553, %v547
          %v555 = vadd.f32 %v554, %v548
          %v556 = vadd.f32 %v555, %v549
          %v557 = vadd.f32 %v556, %v550
          %v558 = vadd.f32 %v557, %v551
          %v559 = vadd.f32 %v552, %v558
          %560 = vst [vmem:[%s220] sm:$0xff] %v559
        $region44: #{tpu_custom_call.1} parent=27 // pred_fallthru
          _
        %s561 = sand.u32 %s103, 1
        %s562 = scalar_lea.sflag [#allocation5], %s561
        %s563 = sand.u32 %s103, 1
        %s564 = smul.addr %s563, 8
        %s565 = scalar_lea.vmem [#allocation6], %s564
        // Predicated region
        $region45: #{tpu_custom_call.1} parent=27 // pred_check
          %p566 = pneg %p113
        $region46: #{tpu_custom_call.1} parent=27 // pred_check_branch
          %568 = sbr.rel (%p566) target = $region48
        $region47: #{tpu_custom_call.1} parent=27 // pred_region
          %s570 = ssub.s32 128, 128
          %571 = vsyncadd %s562, %s570
          %s572 = smul.addr %s23, 128
          %s573 = scalar_lea.hbm %s2, %s572
          %s575 = sshll.u32 %s565, 4
          %s576 = int_to_ptr.vmem [resolvable:$true] %s575
          %578 = dma.vmem_to_hbm [thread:$0]  %s576, 128, %s573, %s562
        $region48: #{tpu_custom_call.1} parent=27 // pred_fallthru
          _
      $region28: #{tpu_custom_call.1} parent=5 // pred_fallthru
        _
      %p579 = scmp.le.s32.totalorder 2, %s14
      // Predicated region
      $region49: #{tpu_custom_call.1} parent=5 // pred_check
        %p580 = pneg %p579
      $region50: #{tpu_custom_call.1} parent=5 // pred_check_branch
        %582 = sbr.rel (%p580) target = $region52
      $region51: #{tpu_custom_call.1} parent=5 // pred_region
        %s583 = ssub.s32 %s14, 2
        // Predicated region
        $region53: #{tpu_custom_call.1} parent=51 // pred_check
          %p584 = pneg %p119
        $region54: #{tpu_custom_call.1} parent=51 // pred_check_branch
          %586 = sbr.rel (%p584) target = $region56
        $region55: #{tpu_custom_call.1} parent=51 // pred_region
          %s587 = sand.u32 %s104, 1
          %s588 = scalar_lea.sflag [#allocation5], %s587
          %s589 = sand.u32 %s104, 1
          %s590 = smul.addr %s589, 8
          %s591 = scalar_lea.vmem [#allocation6], %s590
          %592 = dma.done %s588, 128
        $region56: #{tpu_custom_call.1} parent=51 // pred_fallthru
          _
      $region52: #{tpu_custom_call.1} parent=5 // pred_fallthru
        _
    $region6: #{tpu_custom_call.1} parent=1 // loop_footer
      %s18 = sadd.s32 1, %s14
    $region7: #{tpu_custom_call.1} parent=1 // loop_footer_branch
      %13 = sbr.rel target = $region3
    $region8: #{tpu_custom_call.1} parent=1 // loop_exit
      _
    %593 = vsyncpa [#allocation4], 1
    %s594 = scalar_lea.sflag [#allocation4], 1
    %595 = vsyncpa %s594, 1
    %596 = vsyncpa [#allocation5], 1
    %s597 = scalar_lea.sflag [#allocation5], 1
    %598 = vsyncpa %s597, 1

</llo_original>
